<compile_context>
chip_gen: v7x
topology: tpu7x:2x2x1
jax: 0.10.0
libtpu: 0.0.40
codegen_flags: <defaults>
</compile_context>

<pallas_src>
import functools

import jax
import jax.numpy as jnp
from jax.experimental import pallas as pl
from jax.experimental.pallas import tpu as pltpu

_LANES = 128


def _swish_kernel(x_ref, o_ref, *, beta):
    # x_ref / o_ref: (tile_rows, 128) VMEM tiles. beta is a compile-time float.
    x = x_ref[...].astype(jnp.float32)
    z = beta * x
    # sigmoid(z) = 0.5*(tanh(z/2)+1): a single EUP push, matches f32 sigmoid
    # to ~1e-7.
    sig = 0.5 * (jnp.tanh(0.5 * z) + 1.0)
    o_ref[...] = (x * sig).astype(o_ref.dtype)


def _swish_2d(x2d, beta, tile_rows):
    """Run the kernel on a (rows, 128) slab."""
    rows = x2d.shape[0]
    itemsize = jnp.dtype(x2d.dtype).itemsize
    # sublane packing: 8 rows/vreg for 4-byte dtypes, 16 for 2-byte, 32 for 1-byte
    align = {4: 8, 2: 16, 1: 32}.get(itemsize, 8)

    if rows <= tile_rows:
        # Single block covering the whole array: full-extent block is exempt
        # from the (8,128) divisibility requirement.
        tr = rows
    else:
        tr = max(align, (tile_rows // align) * align)

    grid = (pl.cdiv(rows, tr),)  # Pallas handles a partial last block.
    n = rows * _LANES

    kernel = functools.partial(_swish_kernel, beta=float(beta))

    return pl.pallas_call(
        kernel,
        out_shape=jax.ShapeDtypeStruct((rows, _LANES), x2d.dtype),
        grid_spec=pltpu.PrefetchScalarGridSpec(
            num_scalar_prefetch=0,
            grid=grid,
            in_specs=[pl.BlockSpec((tr, _LANES), lambda i: (i, 0))],
            out_specs=pl.BlockSpec((tr, _LANES), lambda i: (i, 0)),
        ),
        compiler_params=pltpu.CompilerParams(
            dimension_semantics=("parallel",),   # megacore sharding on v7x
            vmem_limit_bytes=40 << 20,           # 4 x 4 MiB buffers fit on all gens
        ),
        cost_estimate=pl.CostEstimate(
            flops=5 * n,
            transcendentals=n,
            bytes_accessed=2 * n * itemsize,
        ),
    )(x2d)


def swish(x, beta=1.0, *, tile_rows=8192):
    """Elementwise Swish via a Pallas TPU kernel. Matches torch semantics.

    beta must be a static Python scalar (module default trainable_beta=False).
    """
    orig_shape = x.shape
    orig_dtype = x.dtype
    n = x.size
    if n == 0:
        return x

    beta = float(beta)
    x_flat = jnp.ravel(x)

    n_main = (n // _LANES) * _LANES  # 128-aligned prefix -> fast kernel path
    n_tail = n - n_main             # <128-element ragged tail -> plain jnp

    parts = []
    if n_main:
        x2d = x_flat[:n_main].reshape(n_main // _LANES, _LANES)
        out_main = _swish_2d(x2d, beta, tile_rows)
        parts.append(out_main.reshape(-1))
    if n_tail:
        # Tiny tail: computing it in jnp avoids a full-array pad (extra HBM
        # read+write) before the kernel and a full-array slice after it.
        t = x_flat[n_main:].astype(jnp.float32)
        tail = (t * (0.5 * (jnp.tanh(0.5 * (beta * t)) + 1.0))).astype(orig_dtype)
        parts.append(tail)

    out_flat = parts[0] if len(parts) == 1 else jnp.concatenate(parts)
    return out_flat.reshape(orig_shape)


if __name__ == "__main__":
    key = jax.random.PRNGKey(0)
    # NCHW-like input, as the PyTorch autoencoder would feed the activation.
    x = jax.random.normal(key, (2, 4, 16, 16), dtype=jnp.float32)

    # Module default: trainable_beta=False, initial_beta=1.0
    beta = 1.0

    y = swish(x, beta)
    y = jax.block_until_ready(y)

    y_ref = x * jax.nn.sigmoid(beta * x)
    assert y.shape == x.shape and y.dtype == x.dtype
    assert jnp.max(jnp.abs(y - y_ref)) < 1e-5

    # Exercise the ragged (non-multiple-of-128) path as well: 165 elements ->
    # 128-element kernel prefix + 37-element jnp tail.
    k2 = jax.random.PRNGKey(1)
    x2 = jax.random.normal(k2, (5, 33), dtype=jnp.float32)
    y2 = jax.block_until_ready(swish(x2, beta))
    y2_ref = x2 * jax.nn.sigmoid(beta * x2)
    assert y2.shape == x2.shape and y2.dtype == x2.dtype
    assert jnp.max(jnp.abs(y2 - y2_ref)) < 1e-5

    print("KERNEL_OK")
</pallas_src>

<mosaic_0001>
module attributes {stable_mosaic.version = 11 : i64} {
  func.func @_swish_kernel(%arg0: i32, %arg1: memref<16x128xf32, #tpu.memory_space<vmem>>, %arg2: memref<16x128xf32, #tpu.memory_space<vmem>>) attributes {dimension_semantics = [#tpu.dimension_semantics<parallel>], iteration_bounds = array<i64: 1>, scalar_prefetch = 0 : i64, scratch_operands = 0 : i64, tpu.core_type = #tpu.core_type<tc>, window_params = [{transform_indices = @transform_0, window_bounds = array<i64: 16, 128>}, {transform_indices = @transform_1, window_bounds = array<i64: 16, 128>}]} {
    %c0 = arith.constant 0 : index
    %c0_0 = arith.constant 0 : index
    %0 = vector.load %arg1[%c0, %c0_0] : memref<16x128xf32, #tpu.memory_space<vmem>>, vector<16x128xf32>
    %cst = arith.constant 1.000000e+00 : f32
    %1 = vector.broadcast %cst : f32 to vector<16x128xf32>
    %2 = arith.mulf %1, %0 : vector<16x128xf32>
    %cst_1 = arith.constant 5.000000e-01 : f32
    %3 = vector.broadcast %cst_1 : f32 to vector<16x128xf32>
    %4 = arith.mulf %3, %2 : vector<16x128xf32>
    %5 = math.tanh %4 : vector<16x128xf32>
    %cst_2 = arith.constant 1.000000e+00 : f32
    %6 = vector.broadcast %cst_2 : f32 to vector<16x128xf32>
    %7 = arith.addf %5, %6 : vector<16x128xf32>
    %cst_3 = arith.constant 5.000000e-01 : f32
    %8 = vector.broadcast %cst_3 : f32 to vector<16x128xf32>
    %9 = arith.mulf %8, %7 : vector<16x128xf32>
    %10 = arith.mulf %0, %9 : vector<16x128xf32>
    %c0_4 = arith.constant 0 : index
    %c0_5 = arith.constant 0 : index
    %11 = vector.load %arg2[%c0_4, %c0_5] : memref<16x128xf32, #tpu.memory_space<vmem>>, vector<16x128xf32>
    tpu.vector_store %arg2[%c0_4, %c0_5], %10 {strides = array<i32>} : memref<16x128xf32, #tpu.memory_space<vmem>>, vector<16x128xf32>,
    return
  }
  func.func @transform_0(%arg0: i32) -> (i32, i32) {
    %c0_i32 = arith.constant 0 : i32
    %c0_i32_0 = arith.constant 0 : i32
    return %arg0, %c0_i32 : i32, i32
  }
  func.func @transform_1(%arg0: i32) -> (i32, i32) {
    %c0_i32 = arith.constant 0 : i32
    %c0_i32_0 = arith.constant 0 : i32
    return %arg0, %c0_i32 : i32, i32
  }
}

</mosaic_0001>

<llo_original>
// kernel: tpu_custom_call.1
$region0: #{tpu_custom_call.1}
  #allocation0 [shape = 'u32[]', space=smem, size = 0x4, offset = 0x4, fixed_abs, tag = 'smem constant byte address 0x4 - core index']
  #allocation1 [shape = 'u32[144,128]{1,0:T(1,128)}', space=vmem, size = 0x12000, scoped, tag = 'internal scratch']
  %s0 = inlined_call_operand.hbm [shape: f32[16,128], index: 0, kind: input, shape index: {}]
  %s1 = inlined_call_operand.hbm [shape: f32[16,128], index: 1, kind: output, shape index: {}]
  %s2 = sld [smem:[#allocation0]]
  $region18: #{tpu_custom_call.1} parent=0
    _
  %s4 = ssub.s32 1, %s2
  %s5 = scalar_select 0, %s4, %s2
  $region1: #{tpu_custom_call.1} parent=0
    #allocation2 [shape = 'u8[8192]{0}', space=vmem, size = 0x2000, scoped, tag = 'input window, operand 0, single buffered']
    #allocation3 [shape = 's32[1]{0}', space=sflag, size = 0x4, scoped, tag = 'scoped memory for tpu_custom_call.1']
    #allocation4 [shape = 's32[1]{0}', space=sflag, size = 0x4, scoped, tag = 'scoped memory for tpu_custom_call.1']
    #allocation5 [shape = 'u8[8192]{0}', space=vmem, size = 0x2000, scoped, tag = 'output window, operand 0, single buffered']
    %6 = vsyncpa [#allocation3], 0
    %7 = vsyncpa [#allocation4], 0
    // Predicated region
    $region2: #{tpu_custom_call.1} parent=1 // pred_check
      _
    $region3: #{tpu_custom_call.1} parent=1 // pred_check_branch
      %9 = sbr.rel (0) target = $region5
    $region4: #{tpu_custom_call.1} parent=1 // pred_region
      %s11 = ssub.s32 256, 256
      %12 = vsyncadd [#allocation3], %s11
      %s13 = sshll.u32 [#allocation2], 4
      %s14 = int_to_ptr.vmem [resolvable:$true] %s13
      %19 = dma.hbm_to_vmem [thread:$0]  %s0, 256, %s14, [#allocation3], 128, 128, 8
    $region5: #{tpu_custom_call.1} parent=1 // pred_fallthru
      _
    // Predicated region
    $region6: #{tpu_custom_call.1} parent=1 // pred_check
      _
    $region7: #{tpu_custom_call.1} parent=1 // pred_check_branch
      %21 = sbr.rel (0) target = $region9
    $region8: #{tpu_custom_call.1} parent=1 // pred_region
      %22 = dma.done [#allocation3], 256
    $region9: #{tpu_custom_call.1} parent=1 // pred_fallthru
      _
    %v23 = vld [vmem:[#allocation2] sm:$0xff]
    %v24 = vld [vmem:[#allocation2 + $0x8] sm:$0xff]
    %v25 = vmul.f32 %v23, 0.5
    %v26 = vmul.f32 %v24, 0.5
    %v27 = vtanh.pop %v25
    %v28 = vtanh.pop %v26
    %v29 = vadd.f32 %v27, 1.0
    %v30 = vadd.f32 %v28, 1.0
    %v31 = vmul.f32 %v29, 0.5
    %v32 = vmul.f32 %v30, 0.5
    %v33 = vmul.f32 %v23, %v31
    %v34 = vmul.f32 %v24, %v32
    %35 = vst [vmem:[#allocation5] sm:$0xff] %v33
    %36 = vst [vmem:[#allocation5 + $0x8] sm:$0xff] %v34
    // Predicated region
    $region10: #{tpu_custom_call.1} parent=1 // pred_check
      _
    $region11: #{tpu_custom_call.1} parent=1 // pred_check_branch
      %38 = sbr.rel (0) target = $region13
    $region12: #{tpu_custom_call.1} parent=1 // pred_region
      %s40 = ssub.s32 256, 256
      %41 = vsyncadd [#allocation4], %s40
      %s42 = sshll.u32 [#allocation5], 4
      %s43 = int_to_ptr.vmem [resolvable:$true] %s42
      %48 = dma.vmem_to_hbm [thread:$0]  %s43, 256, %s1, [#allocation4], 128, 128, 8
    $region13: #{tpu_custom_call.1} parent=1 // pred_fallthru
      _
    // Predicated region
    $region14: #{tpu_custom_call.1} parent=1 // pred_check
      _
    $region15: #{tpu_custom_call.1} parent=1 // pred_check_branch
      %50 = sbr.rel (0) target = $region17
    $region16: #{tpu_custom_call.1} parent=1 // pred_region
      %51 = dma.done [#allocation4], 256
    $region17: #{tpu_custom_call.1} parent=1 // pred_fallthru
      _
    %52 = vsyncpa [#allocation3], 1
    %53 = vsyncpa [#allocation4], 1

</llo_original>
